<compile_context>
chip_gen: v5e
topology: v5e:2x2
jax: 0.10.0
libtpu: 0.0.40
codegen_flags: <defaults>
</compile_context>

<pallas_src>
import functools

import jax
import jax.numpy as jnp
from jax import lax
from jax.experimental import pallas as pl
from jax.experimental.pallas import tpu as pltpu


def _round_up(x, m):
    return ((x + m - 1) // m) * m


def _mlp_prod_decoder_kernel(x_ref, w1t_ref, b1_ref, w2_ref, b2_ref, out_ref, *, E):
    # Split the concatenated embeddings and take their elementwise product (VPU).
    left = x_ref[:, :E].astype(jnp.float32)              # (tb, E)
    right = x_ref[:, E:].astype(jnp.float32)             # (tb, E)
    prod = left * right                                  # (tb, E)

    # h^T = relu(W1^T @ prod^T + b1) -> (H, tb): batch sits on the lane axis.
    # w1t_ref holds W1^T (H, E); contract its E dim against prod's E dim
    # (the well-supported A @ B^T contraction).
    ht = lax.dot_general(
        w1t_ref[...], prod,
        dimension_numbers=(((1,), (1,)), ((), ())),
        preferred_element_type=jnp.float32)              # (H, tb)
    ht = jnp.maximum(ht + b1_ref[...], 0.0)              # b1: (H, 1), lane broadcast

    # out^T = W2^T @ h^T + b2 as a VPU multiply + sublane reduction:
    # no 1-wide MXU matmul, no padded 128-wide output columns.
    out_ref[...] = (
        jnp.sum(ht * w2_ref[...], axis=0, keepdims=True) + b2_ref[...]
    )                                                    # (1, tb), lane-dense in batch


def mlp_prod_decoder_forward(x, w1, b1, w2, b2, *, embedding_size,
                             tile_b=1024, stream_dtype=None):
    """Fused forward pass of MlpProdDecoder.

    x : (B, 2*E)  concatenated left/right embeddings.
    w1: (E, H), b1: (H,), w2: (H, 1), b2: (1,).
    Returns (B, 1) float32 logits, matching the PyTorch module's forward().

    stream_dtype: optional dtype (e.g. jnp.bfloat16) used only to stream x
    HBM->VMEM; the kernel upconverts to f32 before any arithmetic.
    tile_b: batch rows per grid step (sweep 512..2048 for large B).
    """
    B, two_e = x.shape
    E = embedding_size
    H = w1.shape[1]
    assert two_e == 2 * E
    assert w1.shape == (E, H) and b1.shape == (H,)
    assert w2.shape == (H, 1) and b2.shape == (1,)

    f32 = jnp.float32
    if stream_dtype is not None:
        x = x.astype(stream_dtype)

    # Sublane granule for the streamed activation dtype.
    sub = {4: 8, 2: 16, 1: 32}.get(jnp.dtype(x.dtype).itemsize, 8)

    # Batch tiling: split into near-equal tiles rounded only to the sublane
    # granule (bounded padding, never round-up-to-tile).  Give the grid >= 2
    # steps when the batch is splittable so megacore / v7x dual-TC get work.
    B8 = _round_up(B, sub)
    n_tiles = max(1, pl.cdiv(B8, max(tile_b, sub)))
    if n_tiles == 1 and B8 >= 2 * sub:
        n_tiles = 2
    tb = _round_up(pl.cdiv(B8, n_tiles), sub)
    n_tiles = pl.cdiv(B8, tb)
    B_pad = n_tiles * tb
    if B_pad != B:
        x = jnp.pad(x, ((0, B_pad - B), (0, 0)))   # only a handful of zero rows

    # Tiny, VMEM-resident parameters (constant index_maps below).
    w1t = jnp.transpose(w1.astype(f32))            # (H, E)
    b1c = b1.astype(f32).reshape(H, 1)             # (H, 1)
    w2c = w2.astype(f32)                           # (H, 1)
    b2c = b2.astype(f32).reshape(1, 1)             # (1, 1)

    kernel = functools.partial(_mlp_prod_decoder_kernel, E=E)

    out3 = pl.pallas_call(
        kernel,
        out_shape=jax.ShapeDtypeStruct((n_tiles, 1, tb), f32),
        grid_spec=pltpu.PrefetchScalarGridSpec(
            num_scalar_prefetch=0,
            grid=(n_tiles,),
            in_specs=[
                pl.BlockSpec((tb, 2 * E), lambda i: (i, 0)),   # x tile (streamed)
                pl.BlockSpec((H, E), lambda i: (0, 0)),        # W1^T (resident)
                pl.BlockSpec((H, 1), lambda i: (0, 0)),        # b1   (resident)
                pl.BlockSpec((H, 1), lambda i: (0, 0)),        # W2   (resident)
                pl.BlockSpec((1, 1), lambda i: (0, 0)),        # b2   (resident)
            ],
            out_specs=pl.BlockSpec((None, 1, tb), lambda i: (i, 0, 0)),
        ),
        compiler_params=pltpu.CompilerParams(
            dimension_semantics=("parallel",)),
    )(x, w1t, b1c, w2c, b2c)

    # (n_tiles, 1, tb) -> flat batch-major vector -> (B, 1).
    return out3.reshape(n_tiles * tb)[:B].reshape(B, 1)


if __name__ == "__main__":
    key = jax.random.PRNGKey(0)
    k1, k2, k3, k4, k5, k6 = jax.random.split(key, 6)

    # Small shapes consistent with the module: embedding_size=32, hidden_size=64.
    B, E, H = 8, 32, 64
    x = jax.random.normal(k1, (B, 2 * E), jnp.float32)
    w1 = jax.random.normal(k2, (E, H), jnp.float32) * (1.0 / jnp.sqrt(E))
    b1 = jax.random.normal(k3, (H,), jnp.float32) * 0.01
    w2 = jax.random.normal(k4, (H, 1), jnp.float32) * (1.0 / jnp.sqrt(H))
    b2 = jax.random.normal(k5, (1,), jnp.float32) * 0.01

    def ref_forward(xx):
        left, right = xx[:, :E], xx[:, E:]
        h = jnp.maximum((left * right) @ w1 + b1, 0.0)
        # Second projection written as an f32 multiply+sum (mathematically
        # identical to h @ w2, numerically matches the kernel's VPU path).
        return jnp.sum(h * w2.reshape(1, H), axis=1, keepdims=True) + b2

    # 1) Exact f32 path.
    out = mlp_prod_decoder_forward(x, w1, b1, w2, b2, embedding_size=E)
    jax.block_until_ready(out)
    assert out.shape == (B, 1) and out.dtype == jnp.float32
    assert jnp.allclose(out, ref_forward(x), atol=1e-3, rtol=1e-3)

    # 2) bf16-streamed activations (halved input DMA; f32 compute/accumulation).
    out_bf16 = mlp_prod_decoder_forward(x, w1, b1, w2, b2, embedding_size=E,
                                        stream_dtype=jnp.bfloat16)
    jax.block_until_ready(out_bf16)
    x_q = x.astype(jnp.bfloat16).astype(jnp.float32)
    assert jnp.allclose(out_bf16, ref_forward(x_q), atol=1e-3, rtol=1e-3)

    # 3) Multi-tile grid (exercises batch tiling / padding / output stitching).
    B2 = 40
    x2 = jax.random.normal(k6, (B2, 2 * E), jnp.float32)
    out2 = mlp_prod_decoder_forward(x2, w1, b1, w2, b2, embedding_size=E)
    jax.block_until_ready(out2)
    assert out2.shape == (B2, 1)
    assert jnp.allclose(out2, ref_forward(x2), atol=1e-3, rtol=1e-3)

    print("KERNEL_OK")
</pallas_src>

<mosaic_0001>
module attributes {stable_mosaic.version = 11 : i64} {
  func.func @_mlp_prod_decoder_kernel(%arg0: i32, %arg1: memref<8x64xf32, #tpu.memory_space<vmem>>, %arg2: memref<64x32xf32, #tpu.memory_space<vmem>>, %arg3: memref<64x1xf32, #tpu.memory_space<vmem>>, %arg4: memref<64x1xf32, #tpu.memory_space<vmem>>, %arg5: memref<1x1xf32, #tpu.memory_space<vmem>>, %arg6: memref<1x1x8xf32, #tpu.memory_space<vmem>>) attributes {dimension_semantics = [#tpu.dimension_semantics<parallel>], iteration_bounds = array<i64: 1>, scalar_prefetch = 0 : i64, scratch_operands = 0 : i64, tpu.core_type = #tpu.core_type<tc>, window_params = [{transform_indices = @transform_0, window_bounds = array<i64: 8, 64>}, {pipeline_mode = #tpu.pipeline_mode<synchronous>, transform_indices = @transform_1, window_bounds = array<i64: 64, 32>}, {pipeline_mode = #tpu.pipeline_mode<synchronous>, transform_indices = @transform_2, window_bounds = array<i64: 64, 1>}, {pipeline_mode = #tpu.pipeline_mode<synchronous>, transform_indices = @transform_3, window_bounds = array<i64: 64, 1>}, {pipeline_mode = #tpu.pipeline_mode<synchronous>, transform_indices = @transform_4, window_bounds = array<i64: 1, 1>}, {transform_indices = @transform_5, window_bounds = array<i64: 1, 1, 8>}]} {
    %c0 = arith.constant 0 : index
    %c0_0 = arith.constant 0 : index
    %0 = vector.load %arg1[%c0, %c0_0] : memref<8x64xf32, #tpu.memory_space<vmem>>, vector<8x32xf32>
    %c0_1 = arith.constant 0 : index
    %c32 = arith.constant 32 : index
    %1 = vector.load %arg1[%c0_1, %c32] : memref<8x64xf32, #tpu.memory_space<vmem>>, vector<8x32xf32>
    %2 = arith.mulf %0, %1 : vector<8x32xf32>
    %c0_2 = arith.constant 0 : index
    %c0_3 = arith.constant 0 : index
    %3 = vector.load %arg2[%c0_2, %c0_3] : memref<64x32xf32, #tpu.memory_space<vmem>>, vector<64x32xf32>
    %cst = arith.constant dense<0.000000e+00> : vector<64x8xf32>
    %4 = tpu.matmul %3, %2, %cst {dimension_numbers = #tpu.dot_dimension_numbers<[1], [1], [0], [0], [0, 0, 1, 0], [], []>} : vector<64x32xf32>, vector<8x32xf32>, vector<64x8xf32> -> vector<64x8xf32>
    %c0_4 = arith.constant 0 : index
    %c0_5 = arith.constant 0 : index
    %5 = vector.load %arg3[%c0_4, %c0_5] : memref<64x1xf32, #tpu.memory_space<vmem>>, vector<64x1xf32>
    %6 = vector.broadcast %5 : vector<64x1xf32> to vector<64x8xf32>
    %7 = arith.addf %4, %6 : vector<64x8xf32>
    %cst_6 = arith.constant 0.000000e+00 : f32
    %8 = vector.broadcast %cst_6 : f32 to vector<64x8xf32>
    %9 = arith.maximumf %7, %8 : vector<64x8xf32>
    %c0_7 = arith.constant 0 : index
    %c0_8 = arith.constant 0 : index
    %10 = vector.load %arg4[%c0_7, %c0_8] : memref<64x1xf32, #tpu.memory_space<vmem>>, vector<64x1xf32>
    %11 = vector.broadcast %10 : vector<64x1xf32> to vector<64x8xf32>
    %12 = arith.mulf %9, %11 : vector<64x8xf32>
    %cst_9 = arith.constant dense<0.000000e+00> : vector<8xf32>
    %13 = vector.multi_reduction <add>, %12, %cst_9 [0] : vector<64x8xf32> to vector<8xf32>
    %14 = vector.shape_cast %13 : vector<8xf32> to vector<1x8xf32>
    %c0_10 = arith.constant 0 : index
    %c0_11 = arith.constant 0 : index
    %15 = vector.load %arg5[%c0_10, %c0_11] : memref<1x1xf32, #tpu.memory_space<vmem>>, vector<1x1xf32>
    %16 = vector.broadcast %15 : vector<1x1xf32> to vector<1x8xf32>
    %17 = arith.addf %14, %16 : vector<1x8xf32>
    %c0_12 = arith.constant 0 : index
    %c0_13 = arith.constant 0 : index
    %c0_14 = arith.constant 0 : index
    %18 = vector.load %arg6[%c0_12, %c0_13, %c0_14] : memref<1x1x8xf32, #tpu.memory_space<vmem>>, vector<1x1x8xf32>
    %19 = vector.shape_cast %18 : vector<1x1x8xf32> to vector<1x8xf32>
    %20 = vector.shape_cast %17 : vector<1x8xf32> to vector<1x1x8xf32>
    tpu.vector_store %arg6[%c0_12, %c0_13, %c0_14], %20 {strides = array<i32>} : memref<1x1x8xf32, #tpu.memory_space<vmem>>, vector<1x1x8xf32>,
    return
  }
  func.func @transform_0(%arg0: i32) -> (i32, i32) {
    %c0_i32 = arith.constant 0 : i32
    %c0_i32_0 = arith.constant 0 : i32
    return %arg0, %c0_i32 : i32, i32
  }
  func.func @transform_1(%arg0: i32) -> (i32, i32) {
    %c0_i32 = arith.constant 0 : i32
    %c0_i32_0 = arith.constant 0 : i32
    %c0_i32_1 = arith.constant 0 : i32
    return %c0_i32, %c0_i32_0 : i32, i32
  }
  func.func @transform_2(%arg0: i32) -> (i32, i32) {
    %c0_i32 = arith.constant 0 : i32
    %c0_i32_0 = arith.constant 0 : i32
    %c0_i32_1 = arith.constant 0 : i32
    return %c0_i32, %c0_i32_0 : i32, i32
  }
  func.func @transform_3(%arg0: i32) -> (i32, i32) {
    %c0_i32 = arith.constant 0 : i32
    %c0_i32_0 = arith.constant 0 : i32
    %c0_i32_1 = arith.constant 0 : i32
    return %c0_i32, %c0_i32_0 : i32, i32
  }
  func.func @transform_4(%arg0: i32) -> (i32, i32) {
    %c0_i32 = arith.constant 0 : i32
    %c0_i32_0 = arith.constant 0 : i32
    %c0_i32_1 = arith.constant 0 : i32
    return %c0_i32, %c0_i32_0 : i32, i32
  }
  func.func @transform_5(%arg0: i32) -> (i32, i32, i32) {
    %c0_i32 = arith.constant 0 : i32
    %c0_i32_0 = arith.constant 0 : i32
    %c0_i32_1 = arith.constant 0 : i32
    return %arg0, %c0_i32, %c0_i32_0 : i32, i32, i32
  }
}

</mosaic_0001>

<llo_original>
// kernel: tpu_custom_call.1
$region0: #{tpu_custom_call.1}
  #allocation0 [shape = 'u32[]', space=smem, size = 0x4, offset = 0x4, fixed_abs, tag = 'smem constant byte address 0x4 - core index']
  #allocation1 [shape = 'u32[72,128]{1,0:T(1,128)}', space=vmem, size = 0x9000, scoped, tag = 'internal scratch']
  #allocation2 [shape = 'f32[1,1]{1,0:T(1,128)S(1)}', space=vmem, size = 0x200, scoped, tag = 'scoped memory for tpu_custom_call.1']
  %s0 = inlined_call_operand.vmem [shape: f32[8,64], index: 0, kind: input, shape index: {}]
  %s1 = inlined_call_operand.vmem [shape: f32[64,32], index: 1, kind: input, shape index: {}]
  %s2 = inlined_call_operand.vmem [shape: f32[64,1], index: 2, kind: input, shape index: {}]
  %s3 = inlined_call_operand.vmem [shape: f32[64,1], index: 3, kind: input, shape index: {}]
  %s4 = inlined_call_operand.<no memory space> [shape: f32[1,1], index: 4, kind: input, shape index: {}]
  %s5 = inlined_call_operand.hbm [shape: f32[1,1,8], index: 5, kind: output, shape index: {}]
  %s6 = sld [smem:[#allocation0]]
  $region30: #{tpu_custom_call.1} parent=0
    _
  %s8 = ssub.s32 1, %s6
  %s9 = scalar_select 0, %s8, %s6
  %v10 = vstv %s4
  %11 = vst [vmem:[#allocation2] sm:$0x1] %v10
  $region1: #{tpu_custom_call.1} parent=0
    #allocation3 [shape = 'u8[512]{0}', space=vmem, size = 0x400, scoped, tag = 'output window, operand 0, single buffered']
    #allocation4 [shape = 's32[1]{0}', space=sflag, size = 0x4, scoped, tag = 'scoped memory for tpu_custom_call.1']
    %12 = vsyncpa [#allocation4], 0
    // Predicated region
    $region2: #{tpu_custom_call.1} parent=1 // pred_check
      _
    $region3: #{tpu_custom_call.1} parent=1 // pred_check_branch
      %14 = sbr.rel (0) target = $region5
    $region4: #{tpu_custom_call.1} parent=1 // pred_region
      _
    $region5: #{tpu_custom_call.1} parent=1 // pred_fallthru
      _
    // Predicated region
    $region6: #{tpu_custom_call.1} parent=1 // pred_check
      _
    $region7: #{tpu_custom_call.1} parent=1 // pred_check_branch
      %16 = sbr.rel (0) target = $region9
    $region8: #{tpu_custom_call.1} parent=1 // pred_region
      _
    $region9: #{tpu_custom_call.1} parent=1 // pred_fallthru
      _
    // Predicated region
    $region10: #{tpu_custom_call.1} parent=1 // pred_check
      _
    $region11: #{tpu_custom_call.1} parent=1 // pred_check_branch
      %18 = sbr.rel (0) target = $region13
    $region12: #{tpu_custom_call.1} parent=1 // pred_region
      _
    $region13: #{tpu_custom_call.1} parent=1 // pred_fallthru
      _
    // Predicated region
    $region14: #{tpu_custom_call.1} parent=1 // pred_check
      _
    $region15: #{tpu_custom_call.1} parent=1 // pred_check_branch
      %20 = sbr.rel (0) target = $region17
    $region16: #{tpu_custom_call.1} parent=1 // pred_region
      _
    $region17: #{tpu_custom_call.1} parent=1 // pred_fallthru
      _
    // Predicated region
    $region18: #{tpu_custom_call.1} parent=1 // pred_check
      _
    $region19: #{tpu_custom_call.1} parent=1 // pred_check_branch
      %22 = sbr.rel (0) target = $region21
    $region20: #{tpu_custom_call.1} parent=1 // pred_region
      _
    $region21: #{tpu_custom_call.1} parent=1 // pred_fallthru
      _
    %v23 = vld [vmem:[%s0] sm:$0xff]
    %25 = vrot.lane.b32.xlu0 %v23, 96
    %v26 = vpop.permute.xlu0 %25
    %v28 = vmul.f32 %v23, %v26
    %v29 = vld [vmem:[%s1] sm:$0xff]
    %v30 = vld [vmem:[%s1 + $0x8] sm:$0xff]
    %v31 = vld [vmem:[%s1 + $0x10] sm:$0xff]
    %v32 = vld [vmem:[%s1 + $0x18] sm:$0xff]
    %v33 = vld [vmem:[%s1 + $0x20] sm:$0xff]
    %v34 = vld [vmem:[%s1 + $0x28] sm:$0xff]
    %v35 = vld [vmem:[%s1 + $0x30] sm:$0xff]
    %v36 = vld [vmem:[%s1 + $0x38] sm:$0xff]
    %v37 = vld [vmem:[%s2] sm:$0xff]
    %v38 = vld [vmem:[%s2 + $0x8] sm:$0xff]
    %v39 = vld [vmem:[%s2 + $0x10] sm:$0xff]
    %v40 = vld [vmem:[%s2 + $0x18] sm:$0xff]
    %v41 = vld [vmem:[%s2 + $0x20] sm:$0xff]
    %v42 = vld [vmem:[%s2 + $0x28] sm:$0xff]
    %v43 = vld [vmem:[%s2 + $0x30] sm:$0xff]
    %v44 = vld [vmem:[%s2 + $0x38] sm:$0xff]
    %46 = vset.pattern.permute.xlu0 0
    %47 = vperm.xlu0 %46, %v37
    %v48 = vpop.permute.xlu0 %47
    %51 = vset.pattern.permute.xlu0 0
    %52 = vperm.xlu0 %51, %v38
    %v53 = vpop.permute.xlu0 %52
    %56 = vset.pattern.permute.xlu0 0
    %57 = vperm.xlu0 %56, %v39
    %v58 = vpop.permute.xlu0 %57
    %61 = vset.pattern.permute.xlu0 0
    %62 = vperm.xlu0 %61, %v40
    %v63 = vpop.permute.xlu0 %62
    %66 = vset.pattern.permute.xlu0 0
    %67 = vperm.xlu0 %66, %v41
    %v68 = vpop.permute.xlu0 %67
    %71 = vset.pattern.permute.xlu0 0
    %72 = vperm.xlu0 %71, %v42
    %v73 = vpop.permute.xlu0 %72
    %76 = vset.pattern.permute.xlu0 0
    %77 = vperm.xlu0 %76, %v43
    %v78 = vpop.permute.xlu0 %77
    %81 = vset.pattern.permute.xlu0 0
    %82 = vperm.xlu0 %81, %v44
    %v83 = vpop.permute.xlu0 %82
    %vm85 = vcmask 261120
    %v87 = vsel %vm85, %v29, 0
    %v90 = vsel %vm85, %v30, 0
    %v93 = vsel %vm85, %v31, 0
    %v96 = vsel %vm85, %v32, 0
    %v99 = vsel %vm85, %v33, 0
    %v102 = vsel %vm85, %v34, 0
    %v105 = vsel %vm85, %v35, 0
    %v108 = vsel %vm85, %v36, 0
    %v111 = vsel %vm85, %v28, 0
    %113 = vmatpush.xpose.msra.mxu0 0.0
    %114 = vmatpush.xpose.msra.mxu0 0.0
    %115 = vmatpush.xpose.msra.mxu0 0.0
    %116 = vmatpush.xpose.msra.mxu0 0.0
    %117 = vmatpush.xpose.msra.mxu0 0.0
    %118 = vmatpush.xpose.msra.mxu0 0.0
    %119 = vmatpush.xpose.msra.mxu0 0.0
    %120 = vmatpush.xpose.msra.mxu0 0.0
    %121 = vmatpush.xpose.msra.mxu0 0.0
    %122 = vmatpush.xpose.msra.mxu0 0.0
    %123 = vmatpush.xpose.msra.mxu0 0.0
    %124 = vmatpush.xpose.msra.mxu0 0.0
    %125 = vmatpush.xpose.msra.mxu0 0.0
    %126 = vmatpush.xpose.msra.mxu0 0.0
    %127 = vmatpush.xpose.msra.mxu0 0.0
    %128 = vmatpush.xpose.msra.mxu0 %v111
    %129 = vmatmul.f32.gmra.mxu0 %v87
    %v130 = vpop.f32.mrf.mxu0
    %v131 = vadd.f32 %v48, %v130
    %132 = vmatmul.f32.gmra.mxu0 %v90
    %v133 = vpop.f32.mrf.mxu0
    %v134 = vadd.f32 %v53, %v133
    %135 = vmatmul.f32.gmra.mxu0 %v93
    %v136 = vpop.f32.mrf.mxu0
    %v137 = vadd.f32 %v58, %v136
    %138 = vmatmul.f32.gmra.mxu0 %v96
    %v139 = vpop.f32.mrf.mxu0
    %v140 = vadd.f32 %v63, %v139
    %141 = vmatmul.f32.gmra.mxu0 %v99
    %v142 = vpop.f32.mrf.mxu0
    %v143 = vadd.f32 %v68, %v142
    %144 = vmatmul.f32.gmra.mxu0 %v102
    %v145 = vpop.f32.mrf.mxu0
    %v146 = vadd.f32 %v73, %v145
    %147 = vmatmul.f32.gmra.mxu0 %v105
    %v148 = vpop.f32.mrf.mxu0
    %v149 = vadd.f32 %v78, %v148
    %150 = vmatmul.f32.gmra.mxu0 %v108
    %v151 = vpop.f32.mrf.mxu0
    %v152 = vadd.f32 %v83, %v151
    %153 = vdwg.mxu0
    %v154 = vmax.f32 %v131, 0.0
    %v155 = vmax.f32 %v134, 0.0
    %v156 = vmax.f32 %v137, 0.0
    %v157 = vmax.f32 %v140, 0.0
    %v158 = vmax.f32 %v143, 0.0
    %v159 = vmax.f32 %v146, 0.0
    %v160 = vmax.f32 %v149, 0.0
    %v161 = vmax.f32 %v152, 0.0
    %v162 = vld [vmem:[%s3] sm:$0xff]
    %v163 = vld [vmem:[%s3 + $0x8] sm:$0xff]
    %v164 = vld [vmem:[%s3 + $0x10] sm:$0xff]
    %v165 = vld [vmem:[%s3 + $0x18] sm:$0xff]
    %v166 = vld [vmem:[%s3 + $0x20] sm:$0xff]
    %v167 = vld [vmem:[%s3 + $0x28] sm:$0xff]
    %v168 = vld [vmem:[%s3 + $0x30] sm:$0xff]
    %v169 = vld [vmem:[%s3 + $0x38] sm:$0xff]
    %171 = vset.pattern.permute.xlu0 0
    %172 = vperm.xlu0 %171, %v162
    %v173 = vpop.permute.xlu0 %172
    %176 = vset.pattern.permute.xlu0 0
    %177 = vperm.xlu0 %176, %v163
    %v178 = vpop.permute.xlu0 %177
    %181 = vset.pattern.permute.xlu0 0
    %182 = vperm.xlu0 %181, %v164
    %v183 = vpop.permute.xlu0 %182
    %186 = vset.pattern.permute.xlu0 0
    %187 = vperm.xlu0 %186, %v165
    %v188 = vpop.permute.xlu0 %187
    %191 = vset.pattern.permute.xlu0 0
    %192 = vperm.xlu0 %191, %v166
    %v193 = vpop.permute.xlu0 %192
    %196 = vset.pattern.permute.xlu0 0
    %197 = vperm.xlu0 %196, %v167
    %v198 = vpop.permute.xlu0 %197
    %201 = vset.pattern.permute.xlu0 0
    %202 = vperm.xlu0 %201, %v168
    %v203 = vpop.permute.xlu0 %202
    %206 = vset.pattern.permute.xlu0 0
    %207 = vperm.xlu0 %206, %v169
    %v208 = vpop.permute.xlu0 %207
    %v210 = vmul.f32 %v154, %v173
    %v211 = vmul.f32 %v155, %v178
    %v212 = vmul.f32 %v156, %v183
    %v213 = vmul.f32 %v157, %v188
    %v214 = vmul.f32 %v158, %v193
    %v215 = vmul.f32 %v159, %v198
    %v216 = vmul.f32 %v160, %v203
    %v217 = vmul.f32 %v161, %v208
    %vm218 = vcmask 64512
    %v219 = vsel %vm218, %v210, 0.0
    %v220 = vsel %vm218, %v211, 0.0
    %v221 = vadd.f32 %v219, %v220
    %v222 = vsel %vm218, %v212, 0.0
    %v223 = vadd.f32 %v221, %v222
    %v224 = vsel %vm218, %v213, 0.0
    %v225 = vadd.f32 %v223, %v224
    %v226 = vsel %vm218, %v214, 0.0
    %v227 = vadd.f32 %v225, %v226
    %v228 = vsel %vm218, %v215, 0.0
    %v229 = vadd.f32 %v227, %v228
    %v230 = vsel %vm218, %v216, 0.0
    %v231 = vadd.f32 %v229, %v230
    %v232 = vsel %vm218, %v217, 0.0
    %v233 = vadd.f32 %v231, %v232
    %v234 = vrot.slane %v233, 4
    %v235 = vadd.f32 %v233, %v234
    %v236 = vrot.slane %v235, 2
    %v237 = vadd.f32 %v235, %v236
    %v238 = vrot.slane %v237, 1
    %v239 = vadd.f32 %v237, %v238
    %v240 = vld [vmem:[#allocation2] sm:$0x1]
    %242 = vset.pattern.permute.xlu0 0
    %243 = vperm.xlu0 %242, %v240
    %v244 = vpop.permute.xlu0 %243
    %v246 = vperm.slane %v244, 0
    %v247 = vadd.f32 %v239, %v246
    %vm248 = vcmask 57344
    %249 = vst.msk [vmem:[#allocation3] sm:$0x1] %vm248, %v247
    // Predicated region
    $region22: #{tpu_custom_call.1} parent=1 // pred_check
      _
    $region23: #{tpu_custom_call.1} parent=1 // pred_check_branch
      %251 = sbr.rel (0) target = $region25
    $region24: #{tpu_custom_call.1} parent=1 // pred_region
      %253 = vsyncadd [#allocation4], 0
      %s255 = sshll.u32 [#allocation3], 4
      %s256 = int_to_ptr.vmem [resolvable:$true] %s255
      %s257 = sshll.u32 %s5, 4
      %s258 = int_to_ptr.hbm [resolvable:$true] %s257
      %260 = dma.vmem_to_hbm [thread:$0]  %s256, 16, %s258, [#allocation4]
    $region25: #{tpu_custom_call.1} parent=1 // pred_fallthru
      _
    // Predicated region
    $region26: #{tpu_custom_call.1} parent=1 // pred_check
      _
    $region27: #{tpu_custom_call.1} parent=1 // pred_check_branch
      %262 = sbr.rel (0) target = $region29
    $region28: #{tpu_custom_call.1} parent=1 // pred_region
      %264 = dma.done [#allocation4], 16
    $region29: #{tpu_custom_call.1} parent=1 // pred_fallthru
      _
    %265 = vsyncpa [#allocation4], 1

</llo_original>
